<compile_context>
chip_gen: v6e
topology: v6e:2x2x1
jax: 0.10.0
libtpu: 0.0.40
codegen_flags: <defaults>
</compile_context>

<pallas_src>
import jax
import jax.numpy as jnp
from jax.experimental import pallas as pl
from jax.experimental.pallas import tpu as pltpu


def _round_up(x, m):
    return ((x + m - 1) // m) * m


def _round_down(x, m):
    return (x // m) * m


def _linear_kernel(x_ref, w_ref, b_ref, o_ref):
    acc = jnp.dot(x_ref[...], w_ref[...], preferred_element_type=jnp.float32)
    acc = acc + b_ref[...]           # bias kept in f32
    o_ref[...] = acc.astype(o_ref.dtype)


# VMEM sizing: ~24 MiB of pipeline tiles + explicit 32 MiB scoped limit.
# 24 MiB fits v7x (64 MiB physical, 32 MiB scoped default) with headroom, and
# the explicit limit raises v5e's 16 MiB scoped default.
_VMEM_PIPELINE_BUDGET = 24 << 20
_VMEM_LIMIT_BYTES = 32 << 20


def stm_forward(flow_x, weight, bias, *, stream_dtype=None, tm_rows=None):
    """flow_x: (B, N, N, H)
       weight: (out_c, in_c) with in_c = N*H, out_c = N  (nn.Linear convention)
       bias:   (out_c,)
       stream_dtype: optional dtype (e.g. jnp.bfloat16) to stream x/w in; the
                     MXU accumulates in f32 and the output stays in flow_x.dtype.
       tm_rows: optional cap on rows-per-tile (in *packed* rows), mainly for tests.
       returns: (B, N, out_c, 1)  (== output.view(B, N, N, 1))
    """
    B, N, N2, H = flow_x.shape
    in_c = N2 * H
    out_c = weight.shape[0]
    assert weight.shape == (out_c, in_c)

    out_dtype = flow_x.dtype
    x_dtype = jnp.dtype(stream_dtype) if stream_dtype is not None else jnp.dtype(out_dtype)

    M, K = B * N, in_c
    x2d = flow_x.reshape(M, K).astype(x_dtype)       # row-major == PyTorch .view
    w_t = weight.T.astype(x_dtype)                   # (K, out_c)

    # --- lane repack: fold g = 128//K rows per MXU row via block-diag weight ---
    g = 1
    if K < 128 and (128 % K == 0) and (M % (128 // K) == 0):
        g = 128 // K
    if g > 1:
        Mp, Kp, Cp = M // g, g * K, g * out_c
        x_in = x2d.reshape(Mp, Kp)                               # same memory
        w_in = jnp.kron(jnp.eye(g, dtype=x_dtype), w_t)          # (Kp, Cp)
        b_in = jnp.tile(bias.astype(jnp.float32), g).reshape(1, Cp)
    else:
        Mp, Kp, Cp = M, K, out_c
        x_in = x2d
        w_in = w_t
        b_in = bias.astype(jnp.float32).reshape(1, Cp)

    # --- TM from the real (lane-padded) VMEM footprint ---
    x_bytes = x_dtype.itemsize
    o_bytes = jnp.dtype(out_dtype).itemsize
    k_pad = _round_up(Kp, 128)
    c_pad = _round_up(Cp, 128)
    row_bytes = 2 * (k_pad * x_bytes + c_pad * o_bytes)          # double-buffered x + out
    fixed_bytes = 2 * (k_pad * c_pad * x_bytes + c_pad * 4)      # resident weight + bias
    budget = max(_VMEM_PIPELINE_BUDGET - fixed_bytes, 8 * row_bytes)

    tm = max(_round_down(budget // row_bytes, 8), 8)
    if tm_rows is not None:
        tm = min(tm, max(int(tm_rows), 1))
    if Mp >= 2048:
        # Keep >= 2 grid steps so v7x megacore has something to shard.
        tm = min(tm, _round_up(Mp // 2, 8))

    if tm >= Mp or Mp <= 8:
        tm = Mp
        grid = 1
    else:
        tm = max(_round_down(tm, 8), 8)
        grid = pl.cdiv(Mp, tm)

    cost = pl.CostEstimate(
        flops=2 * Mp * Kp * Cp,
        transcendentals=0,
        bytes_accessed=(Mp * Kp + Kp * Cp) * x_bytes + Cp * 4 + Mp * Cp * o_bytes,
    )
    cparams = pltpu.CompilerParams(
        dimension_semantics=("parallel",),
        vmem_limit_bytes=_VMEM_LIMIT_BYTES,
    )

    out_packed = pl.pallas_call(
        _linear_kernel,
        out_shape=jax.ShapeDtypeStruct((Mp, Cp), out_dtype),
        grid_spec=pltpu.PrefetchScalarGridSpec(
            num_scalar_prefetch=0,
            grid=(grid,),
            in_specs=[
                pl.BlockSpec((tm, Kp), lambda i: (i, 0)),    # streamed row tiles
                pl.BlockSpec((Kp, Cp), lambda i: (0, 0)),    # VMEM-resident weight
                pl.BlockSpec((1, Cp), lambda i: (0, 0)),     # VMEM-resident bias
            ],
            out_specs=pl.BlockSpec((tm, Cp), lambda i: (i, 0)),
        ),
        compiler_params=cparams,
        cost_estimate=cost,
    )(x_in, w_in, b_in)

    # (Mp, Cp) is row-major identical to (M, out_c) -> output.view(B, N, N, 1)
    return out_packed.reshape(B, N, out_c, 1)


def _ref_forward(flow_x, weight, bias):
    B, N, _, H = flow_x.shape
    return (flow_x.reshape(B * N, N * H) @ weight.T + bias).reshape(B, N, N, 1)


def _make_case(key, B, N, H):
    kx, kw, kb = jax.random.split(key, 3)
    in_c, out_c = N * H, N
    flow_x = jax.random.normal(kx, (B, N, N, H), dtype=jnp.float32)
    bound = 1.0 / (in_c ** 0.5)
    weight = jax.random.uniform(kw, (out_c, in_c), minval=-bound, maxval=bound,
                                dtype=jnp.float32)
    bias = jax.random.uniform(kb, (out_c,), minval=-bound, maxval=bound,
                              dtype=jnp.float32)
    return flow_x, weight, bias


if __name__ == "__main__":
    key = jax.random.PRNGKey(0)
    k1, k2, k3 = jax.random.split(key, 3)

    # 1) Base case (B, N, H) = (2, 8, 4): K=32 -> lane repack g=4, grid=1.
    flow_x, weight, bias = _make_case(k1, B=2, N=8, H=4)
    ref = _ref_forward(flow_x, weight, bias)
    out = jax.block_until_ready(stm_forward(flow_x, weight, bias))
    assert out.shape == (2, 8, 8, 1), out.shape
    assert jnp.allclose(out, ref, atol=1e-5, rtol=1e-5)

    # 2) Packed + multi-tile path: M=128 -> Mp=32, tm=8 -> grid=4 (full blocks).
    flow_x, weight, bias = _make_case(k2, B=16, N=8, H=4)
    ref = _ref_forward(flow_x, weight, bias)
    out = jax.block_until_ready(stm_forward(flow_x, weight, bias, tm_rows=8))
    assert jnp.allclose(out, ref, atol=1e-5, rtol=1e-5)

    # 3) No-repack path (K=128) with a partial last row-block: M=64, tm=24 -> grid=3.
    flow_x, weight, bias = _make_case(k3, B=4, N=16, H=8)
    ref = _ref_forward(flow_x, weight, bias)
    out = jax.block_until_ready(stm_forward(flow_x, weight, bias, tm_rows=24))
    assert out.shape == (4, 16, 16, 1), out.shape
    assert jnp.allclose(out, ref, atol=1e-5, rtol=1e-5)

    # 4) bf16 streaming of x/w (f32 accumulation), looser tolerance.
    flow_x, weight, bias = _make_case(k1, B=2, N=8, H=4)
    ref = _ref_forward(flow_x, weight, bias)
    out = jax.block_until_ready(
        stm_forward(flow_x, weight, bias, stream_dtype=jnp.bfloat16))
    assert jnp.allclose(out, ref, atol=3e-2, rtol=3e-2)

    print("KERNEL_OK")
</pallas_src>

<mosaic_0001>
module attributes {stable_mosaic.version = 11 : i64} {
  func.func @_linear_kernel(%arg0: i32, %arg1: memref<4x128xf32, #tpu.memory_space<vmem>>, %arg2: memref<128x32xf32, #tpu.memory_space<vmem>>, %arg3: memref<1x32xf32, #tpu.memory_space<vmem>>, %arg4: memref<4x32xf32, #tpu.memory_space<vmem>>) attributes {dimension_semantics = [#tpu.dimension_semantics<parallel>], iteration_bounds = array<i64: 1>, scalar_prefetch = 0 : i64, scratch_operands = 0 : i64, tpu.core_type = #tpu.core_type<tc>, window_params = [{transform_indices = @transform_0, window_bounds = array<i64: 4, 128>}, {pipeline_mode = #tpu.pipeline_mode<synchronous>, transform_indices = @transform_1, window_bounds = array<i64: 128, 32>}, {pipeline_mode = #tpu.pipeline_mode<synchronous>, transform_indices = @transform_2, window_bounds = array<i64: 1, 32>}, {transform_indices = @transform_3, window_bounds = array<i64: 4, 32>}]} {
    %c0 = arith.constant 0 : index
    %c0_0 = arith.constant 0 : index
    %0 = vector.load %arg1[%c0, %c0_0] : memref<4x128xf32, #tpu.memory_space<vmem>>, vector<4x128xf32>
    %c0_1 = arith.constant 0 : index
    %c0_2 = arith.constant 0 : index
    %1 = vector.load %arg2[%c0_1, %c0_2] : memref<128x32xf32, #tpu.memory_space<vmem>>, vector<128x32xf32>
    %cst = arith.constant dense<0.000000e+00> : vector<4x32xf32>
    %2 = tpu.matmul %0, %1, %cst {dimension_numbers = #tpu.dot_dimension_numbers<[1], [0], [0], [1], [0, 0, 1, 1], [], []>} : vector<4x128xf32>, vector<128x32xf32>, vector<4x32xf32> -> vector<4x32xf32>
    %c0_3 = arith.constant 0 : index
    %c0_4 = arith.constant 0 : index
    %3 = vector.load %arg3[%c0_3, %c0_4] : memref<1x32xf32, #tpu.memory_space<vmem>>, vector<1x32xf32>
    %4 = vector.broadcast %3 : vector<1x32xf32> to vector<4x32xf32>
    %5 = arith.addf %2, %4 : vector<4x32xf32>
    %c0_5 = arith.constant 0 : index
    %c0_6 = arith.constant 0 : index
    %6 = vector.load %arg4[%c0_5, %c0_6] : memref<4x32xf32, #tpu.memory_space<vmem>>, vector<4x32xf32>
    tpu.vector_store %arg4[%c0_5, %c0_6], %5 {strides = array<i32>} : memref<4x32xf32, #tpu.memory_space<vmem>>, vector<4x32xf32>,
    return
  }
  func.func @transform_0(%arg0: i32) -> (i32, i32) {
    %c0_i32 = arith.constant 0 : i32
    %c0_i32_0 = arith.constant 0 : i32
    return %arg0, %c0_i32 : i32, i32
  }
  func.func @transform_1(%arg0: i32) -> (i32, i32) {
    %c0_i32 = arith.constant 0 : i32
    %c0_i32_0 = arith.constant 0 : i32
    %c0_i32_1 = arith.constant 0 : i32
    return %c0_i32, %c0_i32_0 : i32, i32
  }
  func.func @transform_2(%arg0: i32) -> (i32, i32) {
    %c0_i32 = arith.constant 0 : i32
    %c0_i32_0 = arith.constant 0 : i32
    %c0_i32_1 = arith.constant 0 : i32
    return %c0_i32, %c0_i32_0 : i32, i32
  }
  func.func @transform_3(%arg0: i32) -> (i32, i32) {
    %c0_i32 = arith.constant 0 : i32
    %c0_i32_0 = arith.constant 0 : i32
    return %arg0, %c0_i32 : i32, i32
  }
}

</mosaic_0001>

<llo_original>
// kernel: tpu_custom_call.1
$region0: #{tpu_custom_call.1}
  #allocation0 [shape = 'u32[]', space=smem, size = 0x4, offset = 0x4, fixed_abs, tag = 'smem constant byte address 0x4 - core index']
  #allocation1 [shape = 'u32[144,128]{1,0:T(1,128)}', space=vmem, size = 0x12000, scoped, tag = 'internal scratch']
  %s0 = inlined_call_operand.vmem [shape: f32[4,128], index: 0, kind: input, shape index: {}]
  %s1 = inlined_call_operand.vmem [shape: f32[128,32], index: 1, kind: input, shape index: {}]
  %s2 = inlined_call_operand.vmem [shape: f32[1,32], index: 2, kind: input, shape index: {}]
  %s3 = inlined_call_operand.hbm [shape: f32[4,32], index: 3, kind: output, shape index: {}]
  %s4 = sld [smem:[#allocation0]]
  $region22: #{tpu_custom_call.1} parent=0
    _
  %s6 = ssub.s32 1, %s4
  %s7 = scalar_select 0, %s6, %s4
  $region1: #{tpu_custom_call.1} parent=0
    #allocation2 [shape = 'u8[2048]{0}', space=vmem, size = 0x800, scoped, tag = 'output window, operand 0, single buffered']
    #allocation3 [shape = 's32[1]{0}', space=sflag, size = 0x4, scoped, tag = 'scoped memory for tpu_custom_call.1']
    %8 = vsyncpa [#allocation3], 0
    // Predicated region
    $region2: #{tpu_custom_call.1} parent=1 // pred_check
      _
    $region3: #{tpu_custom_call.1} parent=1 // pred_check_branch
      %10 = sbr.rel (0) target = $region5
    $region4: #{tpu_custom_call.1} parent=1 // pred_region
      _
    $region5: #{tpu_custom_call.1} parent=1 // pred_fallthru
      _
    // Predicated region
    $region6: #{tpu_custom_call.1} parent=1 // pred_check
      _
    $region7: #{tpu_custom_call.1} parent=1 // pred_check_branch
      %12 = sbr.rel (0) target = $region9
    $region8: #{tpu_custom_call.1} parent=1 // pred_region
      _
    $region9: #{tpu_custom_call.1} parent=1 // pred_fallthru
      _
    // Predicated region
    $region10: #{tpu_custom_call.1} parent=1 // pred_check
      _
    $region11: #{tpu_custom_call.1} parent=1 // pred_check_branch
      %14 = sbr.rel (0) target = $region13
    $region12: #{tpu_custom_call.1} parent=1 // pred_region
      _
    $region13: #{tpu_custom_call.1} parent=1 // pred_fallthru
      _
    %v15 = vld [vmem:[%s0] sm:$0xf]
    %v16 = vld [vmem:[%s1] sm:$0xff]
    %v17 = vld [vmem:[%s1 + $0x8] sm:$0xff]
    %v18 = vld [vmem:[%s1 + $0x10] sm:$0xff]
    %v19 = vld [vmem:[%s1 + $0x18] sm:$0xff]
    %v20 = vld [vmem:[%s1 + $0x20] sm:$0xff]
    %v21 = vld [vmem:[%s1 + $0x28] sm:$0xff]
    %v22 = vld [vmem:[%s1 + $0x30] sm:$0xff]
    %v23 = vld [vmem:[%s1 + $0x38] sm:$0xff]
    %v24 = vld [vmem:[%s1 + $0x40] sm:$0xff]
    %v25 = vld [vmem:[%s1 + $0x48] sm:$0xff]
    %v26 = vld [vmem:[%s1 + $0x50] sm:$0xff]
    %v27 = vld [vmem:[%s1 + $0x58] sm:$0xff]
    %v28 = vld [vmem:[%s1 + $0x60] sm:$0xff]
    %v29 = vld [vmem:[%s1 + $0x68] sm:$0xff]
    %v30 = vld [vmem:[%s1 + $0x70] sm:$0xff]
    %v31 = vld [vmem:[%s1 + $0x78] sm:$0xff]
    %v32 = vld [vmem:[%s2] sm:$0x1]
    %v34 = vlaneseq
    %v35 = vshrl.u32 %v34, 7
    %v36 = vsub.s32 0, %v35
    %v37 = vrot.slane %v32, %v36
    %39 = vmatprep.subr.mxu0 0.0
    %40 = vmatpush1.msra.mxu0 %v31
    %41 = vmatprep.subr.mxu0 0.0
    %42 = vmatpush1.msra.mxu0 %v30
    %43 = vmatprep.subr.mxu0 0.0
    %44 = vmatpush1.msra.mxu0 %v29
    %45 = vmatprep.subr.mxu0 0.0
    %46 = vmatpush1.msra.mxu0 %v28
    %47 = vmatprep.subr.mxu0 0.0
    %48 = vmatpush1.msra.mxu0 %v27
    %49 = vmatprep.subr.mxu0 0.0
    %50 = vmatpush1.msra.mxu0 %v26
    %51 = vmatprep.subr.mxu0 0.0
    %52 = vmatpush1.msra.mxu0 %v25
    %53 = vmatprep.subr.mxu0 0.0
    %54 = vmatpush1.msra.mxu0 %v24
    %55 = vmatprep.subr.mxu0 0.0
    %56 = vmatpush1.msra.mxu0 %v23
    %57 = vmatprep.subr.mxu0 0.0
    %58 = vmatpush1.msra.mxu0 %v22
    %59 = vmatprep.subr.mxu0 0.0
    %60 = vmatpush1.msra.mxu0 %v21
    %61 = vmatprep.subr.mxu0 0.0
    %62 = vmatpush1.msra.mxu0 %v20
    %63 = vmatprep.subr.mxu0 0.0
    %64 = vmatpush1.msra.mxu0 %v19
    %65 = vmatprep.subr.mxu0 0.0
    %66 = vmatpush1.msra.mxu0 %v18
    %67 = vmatprep.subr.mxu0 0.0
    %68 = vmatpush1.msra.mxu0 %v17
    %69 = vmatprep.subr.mxu0 0.0
    %70 = vmatpush1.msra.mxu0 %v16
    %71 = vmatprep.subr.mxu0 0.0
    %72 = vmatpush2.msra.mxu0 0.0
    %73 = vmatprep.subr.mxu0 0.0
    %74 = vmatpush2.msra.mxu0 0.0
    %75 = vmatprep.subr.mxu0 0.0
    %76 = vmatpush2.msra.mxu0 0.0
    %77 = vmatprep.subr.mxu0 0.0
    %78 = vmatpush2.msra.mxu0 0.0
    %79 = vmatprep.subr.mxu0 0.0
    %80 = vmatpush2.msra.mxu0 0.0
    %81 = vmatprep.subr.mxu0 0.0
    %82 = vmatpush2.msra.mxu0 0.0
    %83 = vmatprep.subr.mxu0 0.0
    %84 = vmatpush2.msra.mxu0 0.0
    %85 = vmatprep.subr.mxu0 0.0
    %86 = vmatpush2.msra.mxu0 0.0
    %87 = vmatprep.subr.mxu0 0.0
    %88 = vmatpush2.msra.mxu0 0.0
    %89 = vmatprep.subr.mxu0 0.0
    %90 = vmatpush2.msra.mxu0 0.0
    %91 = vmatprep.subr.mxu0 0.0
    %92 = vmatpush2.msra.mxu0 0.0
    %93 = vmatprep.subr.mxu0 0.0
    %94 = vmatpush2.msra.mxu0 0.0
    %95 = vmatprep.subr.mxu0 0.0
    %96 = vmatpush2.msra.mxu0 0.0
    %97 = vmatprep.subr.mxu0 0.0
    %98 = vmatpush2.msra.mxu0 0.0
    %99 = vmatprep.subr.mxu0 0.0
    %100 = vmatpush2.msra.mxu0 0.0
    %101 = vmatprep.subr.mxu0 0.0
    %102 = vmatpush2.msra.mxu0 0.0
    %103 = vmatprep.mubr.f32.mxu0 0.0
    %104 = vmatmul.mubr.f32.gmra.mxu0 %v15
    %v105 = vpop.f32.mrf.mxu0
    %v106 = vadd.f32 %v37, %v105
    %v107 = vpop.f32.mrf.mxu0
    %108 = vdwg.mxu0
    %vm109 = vcmask 257024
    %110 = vst.msk [vmem:[#allocation2] sm:$0xf] %vm109, %v106
    // Predicated region
    $region14: #{tpu_custom_call.1} parent=1 // pred_check
      _
    $region15: #{tpu_custom_call.1} parent=1 // pred_check_branch
      %112 = sbr.rel (0) target = $region17
    $region16: #{tpu_custom_call.1} parent=1 // pred_region
      %s114 = ssub.s32 64, 64
      %115 = vsyncadd [#allocation3], %s114
      %s117 = sshll.u32 [#allocation2], 4
      %s118 = int_to_ptr.vmem [resolvable:$true] %s117
      %120 = dma.vmem_to_hbm [thread:$0]  %s118, 64, %s3, [#allocation3]
    $region17: #{tpu_custom_call.1} parent=1 // pred_fallthru
      _
    // Predicated region
    $region18: #{tpu_custom_call.1} parent=1 // pred_check
      _
    $region19: #{tpu_custom_call.1} parent=1 // pred_check_branch
      %122 = sbr.rel (0) target = $region21
    $region20: #{tpu_custom_call.1} parent=1 // pred_region
      %123 = dma.done [#allocation3], 64
    $region21: #{tpu_custom_call.1} parent=1 // pred_fallthru
      _
    %124 = vsyncpa [#allocation3], 1

</llo_original>
